<compile_context>
chip_gen: v7x
topology: tpu7x:2x2x1
jax: 0.10.0
libtpu: 0.0.40
codegen_flags: <defaults>
</compile_context>

<pallas_src>
import jax
import jax.numpy as jnp
from jax.experimental import pallas as pl
from jax.experimental.pallas import tpu as pltpu


# Hard cap on the effective row tile so the double-buffered blocks can never
# blow past v7x's 64 MiB physical VMEM regardless of caller-supplied row_tile:
# 16384 rows x 64 lanes x 4 B x (2 outputs + pos) x 2 buffers ~= 17 MiB.
_MAX_ROW_TILE = 16384


def _rope_kernel(pos_ref, inv_ref, cos_ref, sin_ref):
    """One row tile of the RoPE cos/sin tables.

    pos_ref: (TN, 1)   int32   -- position ids for this tile
    inv_ref: (1, D2)   float32 -- 1 / base**(2i/dim); same block every step
    cos_ref: (TN, D2)  out     -- cos(pos * inv_freq)
    sin_ref: (TN, D2)  out     -- sin(pos * inv_freq)
    """
    # int32 -> float32 is exact for positions < 2**24 (always true for real
    # context lengths); mirrors torch's float32 `t` in _set_cos_sin_cache, so
    # pos * inv_freq reproduces the cache gather bit-exactly.
    pos = pos_ref[...].astype(jnp.float32)          # (TN, 1)
    freqs = pos * inv_ref[...]                      # (TN, D2) outer product
    cos_ref[...] = jnp.cos(freqs).astype(cos_ref.dtype)
    sin_ref[...] = jnp.sin(freqs).astype(sin_ref.dtype)


def qeff_mistral_rotary_embedding(position_ids, inv_freq, *, row_tile=8192,
                                  out_dtype=jnp.float32, core_parallel=False):
    """position_ids: [B, S] int; inv_freq: [dim//2] float32.

    Returns (cos, sin), each [B, 1, S, 1, dim//2] of dtype `out_dtype`.
    """
    assert row_tile % 8 == 0, "row_tile must be a multiple of 8 (sublane)"
    B, S = position_ids.shape
    D2 = int(inv_freq.shape[0])
    N = B * S

    pos_flat = position_ids.reshape(N, 1).astype(jnp.int32)
    inv_2d = inv_freq.reshape(1, D2).astype(jnp.float32)

    # Row tile: full array if small (block == full dim is always legal),
    # otherwise a multiple-of-8 tile; the final partial block is masked by
    # Pallas.  Clamp so the launch is portable across generations (v7x has
    # only 64 MiB of physical VMEM).
    eff_tile = min(row_tile, _MAX_ROW_TILE)
    tn = N if N <= eff_tile else eff_tile
    grid = (pl.cdiv(N, tn),)

    out_itemsize = jnp.dtype(out_dtype).itemsize
    dim_sem = (pltpu.CORE_PARALLEL,) if core_parallel else ("parallel",)

    cos_flat, sin_flat = pl.pallas_call(
        _rope_kernel,
        out_shape=(
            jax.ShapeDtypeStruct((N, D2), out_dtype),
            jax.ShapeDtypeStruct((N, D2), out_dtype),
        ),
        grid_spec=pltpu.PrefetchScalarGridSpec(
            num_scalar_prefetch=0,
            grid=grid,
            in_specs=[
                pl.BlockSpec((tn, 1), lambda i: (i, 0)),    # per-tile positions
                pl.BlockSpec((1, D2), lambda i: (0, 0)),    # inv_freq (resident)
            ],
            out_specs=(
                pl.BlockSpec((tn, D2), lambda i: (i, 0)),   # cos
                pl.BlockSpec((tn, D2), lambda i: (i, 0)),   # sin
            ),
        ),
        compiler_params=pltpu.CompilerParams(
            dimension_semantics=dim_sem,
        ),
        cost_estimate=pl.CostEstimate(
            flops=N * D2,                        # pos * inv_freq
            transcendentals=2 * N * D2,          # cos + sin
            bytes_accessed=N * 4 + D2 * 4 + 2 * N * D2 * out_itemsize,
        ),
    )(pos_flat, inv_2d)

    # Contiguous (N, D2) -> [B, 1, S, 1, D2] is a free bitcast (no copy).
    cos = cos_flat.reshape(B, 1, S, 1, D2)
    sin = sin_flat.reshape(B, 1, S, 1, D2)
    return cos, sin


def make_inv_freq(dim, base=10000.0):
    # Deterministic "parameter" construction, mirroring the torch __init__.
    return 1.0 / (base ** (jnp.arange(0, dim, 2, dtype=jnp.float32) / dim))


def _reference(position_ids, inv_freq, max_pos):
    # Pure-JAX reference reproducing the torch module exactly (cache + gather).
    t = jnp.arange(max_pos, dtype=jnp.float32)
    freqs = jnp.einsum("i,j->ij", t, inv_freq)
    cos_cached = jnp.cos(freqs)
    sin_cached = jnp.sin(freqs)
    return (
        cos_cached[position_ids][:, None, :, None, :],
        sin_cached[position_ids][:, None, :, None, :],
    )


if __name__ == "__main__":
    key0, key1 = jax.random.split(jax.random.PRNGKey(0))

    # --- Test 1: small shapes, single block -------------------------------
    dim = 32                       # head_dim
    max_position_embeddings = 64
    B, S = 2, 8

    inv_freq = make_inv_freq(dim)                               # (dim//2,)
    position_ids = jax.random.randint(
        key0, (B, S), minval=0, maxval=max_position_embeddings, dtype=jnp.int32
    )

    cos, sin = qeff_mistral_rotary_embedding(position_ids, inv_freq)
    cos, sin = jax.block_until_ready((cos, sin))

    cos_ref, sin_ref = _reference(position_ids, inv_freq, max_position_embeddings)
    assert cos.shape == (B, 1, S, 1, dim // 2)
    assert sin.shape == (B, 1, S, 1, dim // 2)
    assert cos.dtype == jnp.float32 and sin.dtype == jnp.float32
    assert jnp.allclose(cos, cos_ref, atol=1e-6, rtol=1e-6)
    assert jnp.allclose(sin, sin_ref, atol=1e-6, rtol=1e-6)

    # --- Test 2: realistic head_dim, multi-tile grid with partial last tile --
    dim2, max_pos2 = 128, 2048
    B2, S2 = 2, 520                 # N = 1040 rows; row_tile=256 -> 5 blocks
    inv_freq2 = make_inv_freq(dim2)
    position_ids2 = jax.random.randint(
        key1, (B2, S2), minval=0, maxval=max_pos2, dtype=jnp.int32
    )

    cos2, sin2 = qeff_mistral_rotary_embedding(
        position_ids2, inv_freq2, row_tile=256
    )
    cos2, sin2 = jax.block_until_ready((cos2, sin2))

    cos2_ref, sin2_ref = _reference(position_ids2, inv_freq2, max_pos2)
    assert cos2.shape == (B2, 1, S2, 1, dim2 // 2)
    assert sin2.shape == (B2, 1, S2, 1, dim2 // 2)
    assert jnp.allclose(cos2, cos2_ref, atol=1e-4, rtol=1e-4)
    assert jnp.allclose(sin2, sin2_ref, atol=1e-4, rtol=1e-4)

    # --- Test 3: bf16 output variant (halves HBM writes) ---------------------
    cos3, sin3 = qeff_mistral_rotary_embedding(
        position_ids2, inv_freq2, row_tile=256, out_dtype=jnp.bfloat16
    )
    cos3, sin3 = jax.block_until_ready((cos3, sin3))
    assert cos3.dtype == jnp.bfloat16 and sin3.dtype == jnp.bfloat16
    assert jnp.allclose(cos3.astype(jnp.float32), cos2_ref, atol=2e-2, rtol=2e-2)
    assert jnp.allclose(sin3.astype(jnp.float32), sin2_ref, atol=2e-2, rtol=2e-2)

    print("KERNEL_OK")
</pallas_src>

<mosaic_0001>
module attributes {stable_mosaic.version = 11 : i64} {
  func.func @_rope_kernel(%arg0: i32, %arg1: memref<16x1xi32, #tpu.memory_space<vmem>>, %arg2: memref<1x16xf32, #tpu.memory_space<vmem>>, %arg3: memref<16x16xf32, #tpu.memory_space<vmem>>, %arg4: memref<16x16xf32, #tpu.memory_space<vmem>>) attributes {dimension_semantics = [#tpu.dimension_semantics<parallel>], iteration_bounds = array<i64: 1>, scalar_prefetch = 0 : i64, scratch_operands = 0 : i64, tpu.core_type = #tpu.core_type<tc>, window_params = [{transform_indices = @transform_0, window_bounds = array<i64: 16, 1>}, {pipeline_mode = #tpu.pipeline_mode<synchronous>, transform_indices = @transform_1, window_bounds = array<i64: 1, 16>}, {transform_indices = @transform_2, window_bounds = array<i64: 16, 16>}, {transform_indices = @transform_3, window_bounds = array<i64: 16, 16>}]} {
    %c0 = arith.constant 0 : index
    %c0_0 = arith.constant 0 : index
    %0 = vector.load %arg1[%c0, %c0_0] : memref<16x1xi32, #tpu.memory_space<vmem>>, vector<16x1xi32>
    %1 = arith.sitofp %0 : vector<16x1xi32> to vector<16x1xf32>
    %c0_1 = arith.constant 0 : index
    %c0_2 = arith.constant 0 : index
    %2 = vector.load %arg2[%c0_1, %c0_2] : memref<1x16xf32, #tpu.memory_space<vmem>>, vector<1x16xf32>
    %3 = vector.broadcast %1 : vector<16x1xf32> to vector<16x16xf32>
    %4 = vector.broadcast %2 : vector<1x16xf32> to vector<16x16xf32>
    %5 = arith.mulf %3, %4 : vector<16x16xf32>
    %6 = math.cos %5 : vector<16x16xf32>
    %c0_3 = arith.constant 0 : index
    %c0_4 = arith.constant 0 : index
    %7 = vector.load %arg3[%c0_3, %c0_4] : memref<16x16xf32, #tpu.memory_space<vmem>>, vector<16x16xf32>
    tpu.vector_store %arg3[%c0_3, %c0_4], %6 {strides = array<i32>} : memref<16x16xf32, #tpu.memory_space<vmem>>, vector<16x16xf32>,
    %8 = math.sin %5 : vector<16x16xf32>
    %c0_5 = arith.constant 0 : index
    %c0_6 = arith.constant 0 : index
    %9 = vector.load %arg4[%c0_5, %c0_6] : memref<16x16xf32, #tpu.memory_space<vmem>>, vector<16x16xf32>
    tpu.vector_store %arg4[%c0_5, %c0_6], %8 {strides = array<i32>} : memref<16x16xf32, #tpu.memory_space<vmem>>, vector<16x16xf32>,
    return
  }
  func.func @transform_0(%arg0: i32) -> (i32, i32) {
    %c0_i32 = arith.constant 0 : i32
    %c0_i32_0 = arith.constant 0 : i32
    return %arg0, %c0_i32 : i32, i32
  }
  func.func @transform_1(%arg0: i32) -> (i32, i32) {
    %c0_i32 = arith.constant 0 : i32
    %c0_i32_0 = arith.constant 0 : i32
    %c0_i32_1 = arith.constant 0 : i32
    return %c0_i32, %c0_i32_0 : i32, i32
  }
  func.func @transform_2(%arg0: i32) -> (i32, i32) {
    %c0_i32 = arith.constant 0 : i32
    %c0_i32_0 = arith.constant 0 : i32
    return %arg0, %c0_i32 : i32, i32
  }
  func.func @transform_3(%arg0: i32) -> (i32, i32) {
    %c0_i32 = arith.constant 0 : i32
    %c0_i32_0 = arith.constant 0 : i32
    return %arg0, %c0_i32 : i32, i32
  }
}

</mosaic_0001>

<llo_original>
// kernel: tpu_custom_call.1
$region0: #{tpu_custom_call.1}
  #allocation0 [shape = 'u32[]', space=smem, size = 0x4, offset = 0x4, fixed_abs, tag = 'smem constant byte address 0x4 - core index']
  #allocation1 [shape = 'u32[144,128]{1,0:T(1,128)}', space=vmem, size = 0x12000, scoped, tag = 'internal scratch']
  %s0 = inlined_call_operand.vmem [shape: s32[16,1], index: 0, kind: input, shape index: {}]
  %s1 = inlined_call_operand.vmem [shape: f32[1,16], index: 1, kind: input, shape index: {}]
  %s2 = inlined_call_operand.hbm [shape: f32[16,16], index: 2, kind: output, shape index: {0}]
  %s3 = inlined_call_operand.hbm [shape: f32[16,16], index: 3, kind: output, shape index: {1}]
  %4 = xla_tuple %s2, %s3
  %s5 = sld [smem:[#allocation0]]
  $region26: #{tpu_custom_call.1} parent=0
    _
  %s7 = ssub.s32 1, %s5
  %s8 = scalar_select 0, %s7, %s5
  $region1: #{tpu_custom_call.1} parent=0
    #allocation2 [shape = 'u8[8192]{0}', space=vmem, size = 0x2000, scoped, tag = 'output window, operand 0, single buffered']
    #allocation3 [shape = 's32[1]{0}', space=sflag, size = 0x4, scoped, tag = 'scoped memory for tpu_custom_call.1']
    #allocation4 [shape = 'u8[8192]{0}', space=vmem, size = 0x2000, scoped, tag = 'output window, operand 1, single buffered']
    #allocation5 [shape = 's32[1]{0}', space=sflag, size = 0x4, scoped, tag = 'scoped memory for tpu_custom_call.1']
    %9 = vsyncpa [#allocation3], 0
    %10 = vsyncpa [#allocation5], 0
    // Predicated region
    $region2: #{tpu_custom_call.1} parent=1 // pred_check
      _
    $region3: #{tpu_custom_call.1} parent=1 // pred_check_branch
      %12 = sbr.rel (0) target = $region5
    $region4: #{tpu_custom_call.1} parent=1 // pred_region
      _
    $region5: #{tpu_custom_call.1} parent=1 // pred_fallthru
      _
    // Predicated region
    $region6: #{tpu_custom_call.1} parent=1 // pred_check
      _
    $region7: #{tpu_custom_call.1} parent=1 // pred_check_branch
      %14 = sbr.rel (0) target = $region9
    $region8: #{tpu_custom_call.1} parent=1 // pred_region
      _
    $region9: #{tpu_custom_call.1} parent=1 // pred_fallthru
      _
    %v15 = vld [vmem:[%s0] sm:$0xff]
    %v16 = vld [vmem:[%s0 + $0x8] sm:$0xff]
    %v17 = vcvt.s32.f32 %v15
    %v18 = vcvt.s32.f32 %v16
    %v19 = vld [vmem:[%s1] sm:$0x1]
    %21 = vset.pattern.permute.xlu0 0
    %22 = vperm.xlu0 %21, %v17
    %v23 = vpop.permute.xlu0 %22
    %26 = vset.pattern.permute.xlu0 0
    %27 = vperm.xlu0 %26, %v18
    %v28 = vpop.permute.xlu0 %27
    %v31 = vlaneseq
    %v32 = vshrl.u32 %v31, 7
    %v33 = vsub.s32 0, %v32
    %v34 = vrot.slane %v19, %v33
    %v36 = vmul.f32 %v23, %v34
    %v37 = vmul.f32 %v28, %v34
    %v38 = vand.u32 2147483647, %v36
    %vm39 = vcmp.le.f32.partialorder %v38, 0.7853982
    %vm40 = vcmp.lt.s32.totalorder %v36, 0
    %v41 = vand.u32 %v36, 2139095040
    %v42 = vshrl.u32 %v41, 23
    %v43 = vsub.s32 %v42, 127
    %v44 = vand.u32 2147483647, %v36
    %v45 = vand.u32 %v44, 8388607
    %v46 = vor.u32 %v45, 8388608
    %v47 = vsub.s32 0, %v46
    %v48 = vadd.s32 %v43, 1
    %vm49 = vcmp.gt.s32.totalorder %v48, 0
    %v50 = vsel %vm49, %v48, 0
    %v51 = vshrl.u32 %v50, 5
    %v52 = vand.u32 %v50, 31
    %v53 = vsub.s32 32, %v52
    %v54 = vshrl.u32 683565275, %v53
    %v55 = vshll.u32 683565275, %v52
    %v56 = vshrl.u32 2475754826, %v53
    %v57 = vor.u32 %v55, %v56
    %v58 = vshll.u32 2475754826, %v52
    %v59 = vshrl.u32 2131351028, %v53
    %v60 = vor.u32 %v58, %v59
    %v61 = vshll.u32 2131351028, %v52
    %v62 = vshrl.u32 2102212464, %v53
    %v63 = vor.u32 %v61, %v62
    %v64 = vshll.u32 2102212464, %v52
    %v65 = vshrl.u32 920167782, %v53
    %v66 = vor.u32 %v64, %v65
    %v67 = vshll.u32 920167782, %v52
    %v68 = vshrl.u32 1326507024, %v53
    %v69 = vor.u32 %v67, %v68
    %vm70 = vcmp.lt.s32.totalorder %v51, 1
    %vm71 = vcmp.lt.s32.totalorder %v51, 2
    %vm72 = vcmp.lt.s32.totalorder %v51, 3
    %vm73 = vcmp.lt.s32.totalorder %v51, 4
    %v74 = vsel %vm70, %v54, %v57
    %v75 = vsel %vm73, %v63, 2102212464
    %v76 = vsel %vm72, %v60, %v75
    %v77 = vsel %vm71, %v74, %v76
    %v78 = vsel %vm70, %v57, %v60
    %v79 = vsel %vm73, %v66, 920167782
    %v80 = vsel %vm72, %v63, %v79
    %v81 = vsel %vm71, %v78, %v80
    %v82 = vsel %vm70, %v60, %v63
    %v83 = vsel %vm73, %v69, 1326507024
    %v84 = vsel %vm72, %v66, %v83
    %v85 = vsel %vm71, %v82, %v84
    %v86 = vshll.u32 %v46, 8
    %v87 = vmul.u32.u64.compose %v86, %v85
    %v88 = vextract.low.u32 %v87
    %v89 = vextract.high.u32 %v87
    %v90 = vmul.u32.u64.compose %v86, %v81
    %v91 = vextract.low.u32 %v90
    %v92 = vextract.high.u32 %v90
    %v93 = vmul.u32 %v86, %v77
    %v94 = vadd.s32 %v89, %v91
    %vm95 = vc.u32 %v89, %v91
    %v96 = vadd.s32 %v92, 1
    %v97 = vsel %vm95, %v96, %v92
    %v98 = vadd.s32 %v93, %v97
    %v99 = vadd.s32 %v98, 536870912
    %v100 = vshrl.u32 %v99, 30
    %v101 = vshll.u32 %v100, 30
    %v102 = vsub.s32 %v98, %v101
    %vm103 = vcmp.lt.s32.totalorder %v102, 0
    %v104 = vsub.s32 0, %v102
    %v105 = vsel %vm103, %v104, %v102
    %v106 = vclz %v105
    %v107 = vsub.s32 %v106, 2
    %vm108 = vcmp.gt.s32.totalorder 0, %v107
    %v109 = vsel %vm108, 0, %v107
    %v110 = vsub.s32 32, %v109
    %v111 = vshll.u32 %v102, %v109
    %v112 = vshrl.u32 %v94, %v110
    %v113 = vor.u32 %v111, %v112
    %v114 = vsub.s32 4294967266, %v109
    %v115 = vadd.s32 %v114, 127
    %v116 = vshll.u32 %v115, 23
    %v117 = vor.u32 4788187, %v116
    %v118 = vand.u32 2147483647, %v117
    %v120 = vcvt.s32.f32 %v113
    %v121 = vmul.f32 %v120, %v118
    %v122 = vxor.u32 %v121, 2147483648
    %v123 = vsel %vm40, %v122, %v121
    %v124 = vsub.s32 4, %v100
    %v125 = vsel %vm40, %v124, %v100
    %v126 = vsel %vm39, %v36, %v123
    %v127 = vsel %vm39, 0, %v125
    %v128 = vcosq.f32.pop %v126
    %v129 = vsinq.f32.pop %v126
    %vm130 = vweird.f32 %v36
    %v131 = vand.u32 %v127, 3
    %vm132 = vcmp.lt.s32.totalorder %v131, 2
    %vm133 = vcmp.eq.s32.totalorder %v131, 0
    %v134 = vxor.u32 %v129, 2147483648
    %v135 = vsel %vm133, %v128, %v134
    %vm136 = vcmp.eq.s32.totalorder %v131, 2
    %v137 = vxor.u32 %v128, 2147483648
    %v138 = vsel %vm136, %v137, %v129
    %v139 = vsel %vm132, %v135, %v138
    %v140 = vsel %vm130, nan, %v139
    %v141 = vand.u32 2147483647, %v37
    %vm142 = vcmp.le.f32.partialorder %v141, 0.7853982
    %vm143 = vcmp.lt.s32.totalorder %v37, 0
    %v144 = vand.u32 %v37, 2139095040
    %v145 = vshrl.u32 %v144, 23
    %v146 = vsub.s32 %v145, 127
    %v147 = vand.u32 2147483647, %v37
    %v148 = vand.u32 %v147, 8388607
    %v149 = vor.u32 %v148, 8388608
    %v150 = vsub.s32 0, %v149
    %v151 = vadd.s32 %v146, 1
    %vm152 = vcmp.gt.s32.totalorder %v151, 0
    %v153 = vsel %vm152, %v151, 0
    %v154 = vshrl.u32 %v153, 5
    %v155 = vand.u32 %v153, 31
    %v156 = vsub.s32 32, %v155
    %v157 = vshrl.u32 683565275, %v156
    %v158 = vshll.u32 683565275, %v155
    %v159 = vshrl.u32 2475754826, %v156
    %v160 = vor.u32 %v158, %v159
    %v161 = vshll.u32 2475754826, %v155
    %v162 = vshrl.u32 2131351028, %v156
    %v163 = vor.u32 %v161, %v162
    %v164 = vshll.u32 2131351028, %v155
    %v165 = vshrl.u32 2102212464, %v156
    %v166 = vor.u32 %v164, %v165
    %v167 = vshll.u32 2102212464, %v155
    %v168 = vshrl.u32 920167782, %v156
    %v169 = vor.u32 %v167, %v168
    %v170 = vshll.u32 920167782, %v155
    %v171 = vshrl.u32 1326507024, %v156
    %v172 = vor.u32 %v170, %v171
    %vm173 = vcmp.lt.s32.totalorder %v154, 1
    %vm174 = vcmp.lt.s32.totalorder %v154, 2
    %vm175 = vcmp.lt.s32.totalorder %v154, 3
    %vm176 = vcmp.lt.s32.totalorder %v154, 4
    %v177 = vsel %vm173, %v157, %v160
    %v178 = vsel %vm176, %v166, 2102212464
    %v179 = vsel %vm175, %v163, %v178
    %v180 = vsel %vm174, %v177, %v179
    %v181 = vsel %vm173, %v160, %v163
    %v182 = vsel %vm176, %v169, 920167782
    %v183 = vsel %vm175, %v166, %v182
    %v184 = vsel %vm174, %v181, %v183
    %v185 = vsel %vm173, %v163, %v166
    %v186 = vsel %vm176, %v172, 1326507024
    %v187 = vsel %vm175, %v169, %v186
    %v188 = vsel %vm174, %v185, %v187
    %v189 = vshll.u32 %v149, 8
    %v190 = vmul.u32.u64.compose %v189, %v188
    %v191 = vextract.low.u32 %v190
    %v192 = vextract.high.u32 %v190
    %v193 = vmul.u32.u64.compose %v189, %v184
    %v194 = vextract.low.u32 %v193
    %v195 = vextract.high.u32 %v193
    %v196 = vmul.u32 %v189, %v180
    %v197 = vadd.s32 %v192, %v194
    %vm198 = vc.u32 %v192, %v194
    %v199 = vadd.s32 %v195, 1
    %v200 = vsel %vm198, %v199, %v195
    %v201 = vadd.s32 %v196, %v200
    %v202 = vadd.s32 %v201, 536870912
    %v203 = vshrl.u32 %v202, 30
    %v204 = vshll.u32 %v203, 30
    %v205 = vsub.s32 %v201, %v204
    %vm206 = vcmp.lt.s32.totalorder %v205, 0
    %v207 = vsub.s32 0, %v205
    %v208 = vsel %vm206, %v207, %v205
    %v209 = vclz %v208
    %v210 = vsub.s32 %v209, 2
    %vm211 = vcmp.gt.s32.totalorder 0, %v210
    %v212 = vsel %vm211, 0, %v210
    %v213 = vsub.s32 32, %v212
    %v214 = vshll.u32 %v205, %v212
    %v215 = vshrl.u32 %v197, %v213
    %v216 = vor.u32 %v214, %v215
    %v217 = vsub.s32 4294967266, %v212
    %v218 = vadd.s32 %v217, 127
    %v219 = vshll.u32 %v218, 23
    %v220 = vor.u32 4788187, %v219
    %v221 = vand.u32 2147483647, %v220
    %v223 = vcvt.s32.f32 %v216
    %v224 = vmul.f32 %v223, %v221
    %v225 = vxor.u32 %v224, 2147483648
    %v226 = vsel %vm143, %v225, %v224
    %v227 = vsub.s32 4, %v203
    %v228 = vsel %vm143, %v227, %v203
    %v229 = vsel %vm142, %v37, %v226
    %v230 = vsel %vm142, 0, %v228
    %v231 = vcosq.f32.pop %v229
    %v232 = vsinq.f32.pop %v229
    %vm233 = vweird.f32 %v37
    %v234 = vand.u32 %v230, 3
    %vm235 = vcmp.lt.s32.totalorder %v234, 2
    %vm236 = vcmp.eq.s32.totalorder %v234, 0
    %v237 = vxor.u32 %v232, 2147483648
    %v238 = vsel %vm236, %v231, %v237
    %vm239 = vcmp.eq.s32.totalorder %v234, 2
    %v240 = vxor.u32 %v231, 2147483648
    %v241 = vsel %vm239, %v240, %v232
    %v242 = vsel %vm235, %v238, %v241
    %v243 = vsel %vm233, nan, %v242
    %vm244 = vcmask 130048
    %245 = vst.msk [vmem:[#allocation2] sm:$0xff] %vm244, %v140
    %246 = vst.msk [vmem:[#allocation2 + $0x8] sm:$0xff] %vm244, %v243
    %v247 = vand.u32 2147483647, %v36
    %vm248 = vcmp.le.f32.partialorder %v247, 0.7853982
    %vm249 = vcmp.lt.s32.totalorder %v36, 0
    %v250 = vand.u32 %v36, 2139095040
    %v251 = vshrl.u32 %v250, 23
    %v252 = vsub.s32 %v251, 127
    %v253 = vand.u32 2147483647, %v36
    %v254 = vand.u32 %v253, 8388607
    %v255 = vor.u32 %v254, 8388608
    %v256 = vsub.s32 0, %v255
    %v257 = vadd.s32 %v252, 1
    %vm258 = vcmp.gt.s32.totalorder %v257, 0
    %v259 = vsel %vm258, %v257, 0
    %v260 = vshrl.u32 %v259, 5
    %v261 = vand.u32 %v259, 31
    %v262 = vsub.s32 32, %v261
    %v263 = vshrl.u32 683565275, %v262
    %v264 = vshll.u32 683565275, %v261
    %v265 = vshrl.u32 2475754826, %v262
    %v266 = vor.u32 %v264, %v265
    %v267 = vshll.u32 2475754826, %v261
    %v268 = vshrl.u32 2131351028, %v262
    %v269 = vor.u32 %v267, %v268
    %v270 = vshll.u32 2131351028, %v261
    %v271 = vshrl.u32 2102212464, %v262
    %v272 = vor.u32 %v270, %v271
    %v273 = vshll.u32 2102212464, %v261
    %v274 = vshrl.u32 920167782, %v262
    %v275 = vor.u32 %v273, %v274
    %v276 = vshll.u32 920167782, %v261
    %v277 = vshrl.u32 1326507024, %v262
    %v278 = vor.u32 %v276, %v277
    %vm279 = vcmp.lt.s32.totalorder %v260, 1
    %vm280 = vcmp.lt.s32.totalorder %v260, 2
    %vm281 = vcmp.lt.s32.totalorder %v260, 3
    %vm282 = vcmp.lt.s32.totalorder %v260, 4
    %v283 = vsel %vm279, %v263, %v266
    %v284 = vsel %vm282, %v272, 2102212464
    %v285 = vsel %vm281, %v269, %v284
    %v286 = vsel %vm280, %v283, %v285
    %v287 = vsel %vm279, %v266, %v269
    %v288 = vsel %vm282, %v275, 920167782
    %v289 = vsel %vm281, %v272, %v288
    %v290 = vsel %vm280, %v287, %v289
    %v291 = vsel %vm279, %v269, %v272
    %v292 = vsel %vm282, %v278, 1326507024
    %v293 = vsel %vm281, %v275, %v292
    %v294 = vsel %vm280, %v291, %v293
    %v295 = vshll.u32 %v255, 8
    %v296 = vmul.u32.u64.compose %v295, %v294
    %v297 = vextract.low.u32 %v296
    %v298 = vextract.high.u32 %v296
    %v299 = vmul.u32.u64.compose %v295, %v290
    %v300 = vextract.low.u32 %v299
    %v301 = vextract.high.u32 %v299
    %v302 = vmul.u32 %v295, %v286
    %v303 = vadd.s32 %v298, %v300
    %vm304 = vc.u32 %v298, %v300
    %v305 = vadd.s32 %v301, 1
    %v306 = vsel %vm304, %v305, %v301
    %v307 = vadd.s32 %v302, %v306
    %v308 = vadd.s32 %v307, 536870912
    %v309 = vshrl.u32 %v308, 30
    %v310 = vshll.u32 %v309, 30
    %v311 = vsub.s32 %v307, %v310
    %vm312 = vcmp.lt.s32.totalorder %v311, 0
    %v313 = vsub.s32 0, %v311
    %v314 = vsel %vm312, %v313, %v311
    %v315 = vclz %v314
    %v316 = vsub.s32 %v315, 2
    %vm317 = vcmp.gt.s32.totalorder 0, %v316
    %v318 = vsel %vm317, 0, %v316
    %v319 = vsub.s32 32, %v318
    %v320 = vshll.u32 %v311, %v318
    %v321 = vshrl.u32 %v303, %v319
    %v322 = vor.u32 %v320, %v321
    %v323 = vsub.s32 4294967266, %v318
    %v324 = vadd.s32 %v323, 127
    %v325 = vshll.u32 %v324, 23
    %v326 = vor.u32 4788187, %v325
    %v327 = vand.u32 2147483647, %v326
    %v329 = vcvt.s32.f32 %v322
    %v330 = vmul.f32 %v329, %v327
    %v331 = vxor.u32 %v330, 2147483648
    %v332 = vsel %vm249, %v331, %v330
    %v333 = vsub.s32 4, %v309
    %v334 = vsel %vm249, %v333, %v309
    %v335 = vsel %vm248, %v36, %v332
    %v336 = vsel %vm248, 0, %v334
    %v337 = vcosq.f32.pop %v335
    %v338 = vsinq.f32.pop %v335
    %vm339 = vweird.f32 %v36
    %v340 = vadd.s32 %v336, 3
    %v341 = vand.u32 %v340, 3
    %vm342 = vcmp.lt.s32.totalorder %v341, 2
    %vm343 = vcmp.eq.s32.totalorder %v341, 0
    %v344 = vxor.u32 %v338, 2147483648
    %v345 = vsel %vm343, %v337, %v344
    %vm346 = vcmp.eq.s32.totalorder %v341, 2
    %v347 = vxor.u32 %v337, 2147483648
    %v348 = vsel %vm346, %v347, %v338
    %v349 = vsel %vm342, %v345, %v348
    %v350 = vsel %vm339, nan, %v349
    %v351 = vand.u32 2147483647, %v37
    %vm352 = vcmp.le.f32.partialorder %v351, 0.7853982
    %vm353 = vcmp.lt.s32.totalorder %v37, 0
    %v354 = vand.u32 %v37, 2139095040
    %v355 = vshrl.u32 %v354, 23
    %v356 = vsub.s32 %v355, 127
    %v357 = vand.u32 2147483647, %v37
    %v358 = vand.u32 %v357, 8388607
    %v359 = vor.u32 %v358, 8388608
    %v360 = vsub.s32 0, %v359
    %v361 = vadd.s32 %v356, 1
    %vm362 = vcmp.gt.s32.totalorder %v361, 0
    %v363 = vsel %vm362, %v361, 0
    %v364 = vshrl.u32 %v363, 5
    %v365 = vand.u32 %v363, 31
    %v366 = vsub.s32 32, %v365
    %v367 = vshrl.u32 683565275, %v366
    %v368 = vshll.u32 683565275, %v365
    %v369 = vshrl.u32 2475754826, %v366
    %v370 = vor.u32 %v368, %v369
    %v371 = vshll.u32 2475754826, %v365
    %v372 = vshrl.u32 2131351028, %v366
    %v373 = vor.u32 %v371, %v372
    %v374 = vshll.u32 2131351028, %v365
    %v375 = vshrl.u32 2102212464, %v366
    %v376 = vor.u32 %v374, %v375
    %v377 = vshll.u32 2102212464, %v365
    %v378 = vshrl.u32 920167782, %v366
    %v379 = vor.u32 %v377, %v378
    %v380 = vshll.u32 920167782, %v365
    %v381 = vshrl.u32 1326507024, %v366
    %v382 = vor.u32 %v380, %v381
    %vm383 = vcmp.lt.s32.totalorder %v364, 1
    %vm384 = vcmp.lt.s32.totalorder %v364, 2
    %vm385 = vcmp.lt.s32.totalorder %v364, 3
    %vm386 = vcmp.lt.s32.totalorder %v364, 4
    %v387 = vsel %vm383, %v367, %v370
    %v388 = vsel %vm386, %v376, 2102212464
    %v389 = vsel %vm385, %v373, %v388
    %v390 = vsel %vm384, %v387, %v389
    %v391 = vsel %vm383, %v370, %v373
    %v392 = vsel %vm386, %v379, 920167782
    %v393 = vsel %vm385, %v376, %v392
    %v394 = vsel %vm384, %v391, %v393
    %v395 = vsel %vm383, %v373, %v376
    %v396 = vsel %vm386, %v382, 1326507024
    %v397 = vsel %vm385, %v379, %v396
    %v398 = vsel %vm384, %v395, %v397
    %v399 = vshll.u32 %v359, 8
    %v400 = vmul.u32.u64.compose %v399, %v398
    %v401 = vextract.low.u32 %v400
    %v402 = vextract.high.u32 %v400
    %v403 = vmul.u32.u64.compose %v399, %v394
    %v404 = vextract.low.u32 %v403
    %v405 = vextract.high.u32 %v403
    %v406 = vmul.u32 %v399, %v390
    %v407 = vadd.s32 %v402, %v404
    %vm408 = vc.u32 %v402, %v404
    %v409 = vadd.s32 %v405, 1
    %v410 = vsel %vm408, %v409, %v405
    %v411 = vadd.s32 %v406, %v410
    %v412 = vadd.s32 %v411, 536870912
    %v413 = vshrl.u32 %v412, 30
    %v414 = vshll.u32 %v413, 30
    %v415 = vsub.s32 %v411, %v414
    %vm416 = vcmp.lt.s32.totalorder %v415, 0
    %v417 = vsub.s32 0, %v415
    %v418 = vsel %vm416, %v417, %v415
    %v419 = vclz %v418
    %v420 = vsub.s32 %v419, 2
    %vm421 = vcmp.gt.s32.totalorder 0, %v420
    %v422 = vsel %vm421, 0, %v420
    %v423 = vsub.s32 32, %v422
    %v424 = vshll.u32 %v415, %v422
    %v425 = vshrl.u32 %v407, %v423
    %v426 = vor.u32 %v424, %v425
    %v427 = vsub.s32 4294967266, %v422
    %v428 = vadd.s32 %v427, 127
    %v429 = vshll.u32 %v428, 23
    %v430 = vor.u32 4788187, %v429
    %v431 = vand.u32 2147483647, %v430
    %v433 = vcvt.s32.f32 %v426
    %v434 = vmul.f32 %v433, %v431
    %v435 = vxor.u32 %v434, 2147483648
    %v436 = vsel %vm353, %v435, %v434
    %v437 = vsub.s32 4, %v413
    %v438 = vsel %vm353, %v437, %v413
    %v439 = vsel %vm352, %v37, %v436
    %v440 = vsel %vm352, 0, %v438
    %v441 = vcosq.f32.pop %v439
    %v442 = vsinq.f32.pop %v439
    %vm443 = vweird.f32 %v37
    %v444 = vadd.s32 %v440, 3
    %v445 = vand.u32 %v444, 3
    %vm446 = vcmp.lt.s32.totalorder %v445, 2
    %vm447 = vcmp.eq.s32.totalorder %v445, 0
    %v448 = vxor.u32 %v442, 2147483648
    %v449 = vsel %vm447, %v441, %v448
    %vm450 = vcmp.eq.s32.totalorder %v445, 2
    %v451 = vxor.u32 %v441, 2147483648
    %v452 = vsel %vm450, %v451, %v442
    %v453 = vsel %vm446, %v449, %v452
    %v454 = vsel %vm443, nan, %v453
    %455 = vst.msk [vmem:[#allocation4] sm:$0xff] %vm244, %v350
    %456 = vst.msk [vmem:[#allocation4 + $0x8] sm:$0xff] %vm244, %v454
    // Predicated region
    $region10: #{tpu_custom_call.1} parent=1 // pred_check
      _
    $region11: #{tpu_custom_call.1} parent=1 // pred_check_branch
      %458 = sbr.rel (0) target = $region13
    $region12: #{tpu_custom_call.1} parent=1 // pred_region
      %s460 = ssub.s32 256, 256
      %461 = vsyncadd [#allocation3], %s460
      %s462 = sshll.u32 [#allocation2], 4
      %s463 = int_to_ptr.vmem [resolvable:$true] %s462
      %468 = dma.vmem_to_hbm [thread:$0]  %s463, 256, %s2, [#allocation3], 128, 128, 8
    $region13: #{tpu_custom_call.1} parent=1 // pred_fallthru
      _
    // Predicated region
    $region14: #{tpu_custom_call.1} parent=1 // pred_check
      _
    $region15: #{tpu_custom_call.1} parent=1 // pred_check_branch
      %470 = sbr.rel (0) target = $region17
    $region16: #{tpu_custom_call.1} parent=1 // pred_region
      %s472 = ssub.s32 256, 256
      %473 = vsyncadd [#allocation5], %s472
      %s474 = sshll.u32 [#allocation4], 4
      %s475 = int_to_ptr.vmem [resolvable:$true] %s474
      %480 = dma.vmem_to_hbm [thread:$0]  %s475, 256, %s3, [#allocation5], 128, 128, 8
    $region17: #{tpu_custom_call.1} parent=1 // pred_fallthru
      _
    // Predicated region
    $region18: #{tpu_custom_call.1} parent=1 // pred_check
      _
    $region19: #{tpu_custom_call.1} parent=1 // pred_check_branch
      %482 = sbr.rel (0) target = $region21
    $region20: #{tpu_custom_call.1} parent=1 // pred_region
      %483 = dma.done [#allocation3], 256
    $region21: #{tpu_custom_call.1} parent=1 // pred_fallthru
      _
    // Predicated region
    $region22: #{tpu_custom_call.1} parent=1 // pred_check
      _
    $region23: #{tpu_custom_call.1} parent=1 // pred_check_branch
      %485 = sbr.rel (0) target = $region25
    $region24: #{tpu_custom_call.1} parent=1 // pred_region
      %486 = dma.done [#allocation5], 256
    $region25: #{tpu_custom_call.1} parent=1 // pred_fallthru
      _
    %487 = vsyncpa [#allocation3], 1
    %488 = vsyncpa [#allocation5], 1

</llo_original>
